<compile_context>
chip_gen: v7x
topology: tpu7x:2x2x1
jax: 0.10.0
libtpu: 0.0.40
codegen_flags: <defaults>
</compile_context>

<pallas_src>
import functools

import jax
import jax.numpy as jnp
from jax.experimental import pallas as pl
from jax.experimental.pallas import tpu as pltpu

KSIZE = 7
PAD = 3  # padding = 3 for kernel_size = 7

# Pass-1 tuning knobs.
_TARGET_BLOCK_BYTES = 2 * 1024 * 1024   # ~2 MiB input blocks (review item 1/2)
_MAX_HW_TILE = 32768                    # cap on lanes per block
_C_TILE_MAX = 256                       # multiple of 8 / 16 / 32


# -----------------------------------------------------------------------------
# Pass 1: fused channel mean + max (streaming reduction over C).
# -----------------------------------------------------------------------------
def channel_reduce_kernel(x_ref, o_ref, *, C, C_TILE, HW_TILE, SUB, LANE_CHUNK,
                          has_tail):
    # x_ref : VMEM block (1, C_TILE, HW_TILE), native input dtype.
    # o_ref : VMEM block (1, 2, HW_TILE) f32; row 0 = mean, row 1 = max.
    #         Block index is constant along the C grid axis -> resident
    #         accumulator, written back to HBM after the last C step.
    c_idx = pl.program_id(2)
    last_c = pl.num_programs(2) - 1

    n_full = C_TILE // SUB
    rem = C_TILE - SUB * n_full  # nonzero only when C_TILE == C -> rows all valid

    # Static lane sub-tiles: big DMA block, bounded vreg pressure in compute.
    lane_chunks = []
    off = 0
    while off < HW_TILE:
        sz = min(LANE_CHUNK, HW_TILE - off)
        lane_chunks.append((off, sz))
        off += sz

    def reduce_and_accumulate(mask_rows):
        c_start = c_idx * C_TILE
        for ls, lsz in lane_chunks:
            sum_acc = None
            max_acc = None
            # SUB-row (dtype-native sublane) chunks: each load feeds both the
            # running sum and the running max -> single pass over the block.
            for j in range(n_full):
                chunk = x_ref[0, SUB * j:SUB * j + SUB, ls:ls + lsz].astype(
                    jnp.float32)
                if mask_rows:
                    rows = c_start + SUB * j + jax.lax.broadcasted_iota(
                        jnp.int32, chunk.shape, 0)
                    valid = rows < C
                    ch_s = jnp.where(valid, chunk, 0.0)
                    ch_m = jnp.where(valid, chunk, -jnp.inf)
                else:
                    ch_s = ch_m = chunk
                if sum_acc is None:
                    sum_acc, max_acc = ch_s, ch_m
                else:
                    sum_acc = sum_acc + ch_s
                    max_acc = jnp.maximum(max_acc, ch_m)

            sums, maxs = [], []
            if sum_acc is not None:
                sums.append(jnp.sum(sum_acc, axis=0, keepdims=True))
                maxs.append(jnp.max(max_acc, axis=0, keepdims=True))
            if rem:
                # Only reached when C_TILE == C (single C step): rows are all
                # valid, so no masking is ever required here.
                tail = x_ref[0, SUB * n_full:C_TILE, ls:ls + lsz].astype(
                    jnp.float32)
                sums.append(jnp.sum(tail, axis=0, keepdims=True))
                maxs.append(jnp.max(tail, axis=0, keepdims=True))

            psum = sums[0] if len(sums) == 1 else sums[0] + sums[1]
            pmax = maxs[0] if len(maxs) == 1 else jnp.maximum(maxs[0], maxs[1])

            @pl.when(c_idx == 0)
            def _init():
                o_ref[0, 0:1, ls:ls + lsz] = psum
                o_ref[0, 1:2, ls:ls + lsz] = pmax

            @pl.when(c_idx > 0)
            def _accum():
                o_ref[0, 0:1, ls:ls + lsz] = o_ref[0, 0:1, ls:ls + lsz] + psum
                o_ref[0, 1:2, ls:ls + lsz] = jnp.maximum(
                    o_ref[0, 1:2, ls:ls + lsz], pmax)

    if has_tail:
        # Masking only on the last C step (review: keep it off the hot path).
        @pl.when(c_idx < last_c)
        def _full_steps():
            reduce_and_accumulate(False)

        @pl.when(c_idx == last_c)
        def _tail_step():
            reduce_and_accumulate(True)
    else:
        reduce_and_accumulate(False)

    @pl.when(c_idx == last_c)
    def _finalize():
        inv_c = 1.0 / C
        for ls, lsz in lane_chunks:
            o_ref[0, 0:1, ls:ls + lsz] = o_ref[0, 0:1, ls:ls + lsz] * inv_c


# -----------------------------------------------------------------------------
# Pass 2: 7x7 conv over the 2-channel [avg, max] map + sigmoid (NB images/step).
# -----------------------------------------------------------------------------
def conv_sigmoid_kernel(w_ref, f_ref, o_ref, pad_ref, *, H, W, NB):
    # w_ref  : SMEM (2*K*K,) flattened OIHW conv weight (idx = c*K*K + kh*K + kw)
    # f_ref  : VMEM (NB, 2, H, W) f32 [avg, max] maps
    # o_ref  : VMEM (NB, 1, H, W)
    # pad_ref: VMEM scratch (NB, 2, Hp, Wp) f32 — (8,128)-aligned zero-padded planes
    #
    # Zero the scratch ONCE: the interior is fully overwritten every step and
    # the border is never touched, so it stays zero across the (sequential,
    # "arbitrary") grid.
    @pl.when(pl.program_id(0) == 0)
    def _zero():
        pad_ref[...] = jnp.zeros_like(pad_ref)

    for b in range(NB):
        for ch in range(2):
            pad_ref[b, ch, PAD:PAD + H, PAD:PAD + W] = f_ref[b, ch].astype(
                jnp.float32)

    for b in range(NB):
        acc = jnp.zeros((H, W), jnp.float32)
        for ch in range(2):
            # Hoist the 7 lane (kw) shifts out of the tap loop: 7 shifted views
            # per channel instead of 49 per-tap lane-crossing slices.
            cols = [pad_ref[b, ch, :, kw:kw + W] for kw in range(KSIZE)]
            for kh in range(KSIZE):
                base = ch * KSIZE * KSIZE + kh * KSIZE
                t = cols[0] * w_ref[base]
                for kw in range(1, KSIZE):
                    t = t + cols[kw] * w_ref[base + kw]
                acc = acc + t[kh:kh + H, :]       # sublane-offset slice only
        o_ref[b, 0] = jax.nn.sigmoid(acc).astype(o_ref.dtype)


# -----------------------------------------------------------------------------
# Wrapper
# -----------------------------------------------------------------------------
def spatial_attention(x, weight):
    """x: [N, C, H, W]; weight: [1, 2, K, K] (nn.Conv2d OIHW, bias=False)."""
    N, C, H, W = x.shape
    HW = H * W
    itemsize = jnp.dtype(x.dtype).itemsize

    # ---- Pass 1: lane-dense channel reduction ([N, C, HW] -> [N, 2, HW]) ----
    x2 = x.reshape(N, C, HW)                 # free: contiguous reshape in HBM

    SUB = max(8, 32 // itemsize)             # dtype-native sublanes: 8/16/32
    C_TILE = C if C <= _C_TILE_MAX else _C_TILE_MAX
    has_tail = (C % C_TILE) != 0
    n_c = pl.cdiv(C, C_TILE)

    if HW % 128 == 0:
        hw_t = (_TARGET_BLOCK_BYTES // max(1, C_TILE * itemsize)) // 128 * 128
        hw_t = max(128, min(hw_t, HW, _MAX_HW_TILE))
        # v7x has 2 TensorCores: keep the parallel extent >= 2 when possible.
        if N == 1 and hw_t == HW and HW >= 256 and HW % 256 == 0:
            hw_t = HW // 2
        HW_TILE = hw_t
    else:
        HW_TILE = HW                         # full extent satisfies layout rule
    n_s = pl.cdiv(HW, HW_TILE)

    # Compute lane tile: one (SUB, LANE_CHUNK) chunk == 16 vregs in f32.
    LANE_CHUNK = 2048 * 8 // SUB

    reduce_fn = functools.partial(
        channel_reduce_kernel, C=C, C_TILE=C_TILE, HW_TILE=HW_TILE, SUB=SUB,
        LANE_CHUNK=LANE_CHUNK, has_tail=has_tail)
    feat = pl.pallas_call(
        reduce_fn,
        out_shape=jax.ShapeDtypeStruct((N, 2, HW), jnp.float32),
        grid=(N, n_s, n_c),
        in_specs=[pl.BlockSpec((1, C_TILE, HW_TILE), lambda n, s, c: (n, c, s))],
        out_specs=pl.BlockSpec((1, 2, HW_TILE), lambda n, s, c: (n, 0, s)),
        compiler_params=pltpu.CompilerParams(
            dimension_semantics=("parallel", "parallel", "arbitrary")),
    )(x2)

    # ---- Pass 2: 7x7 conv (zero pad, no bias) + sigmoid, NB images/step ----
    feat4 = feat.reshape(N, 2, H, W)         # free reshape
    w_flat = weight.reshape(-1).astype(jnp.float32)
    Hp = ((H + 2 * PAD + 7) // 8) * 8        # sublane-aligned padded height
    Wp = ((W + 2 * PAD + 127) // 128) * 128  # lane-aligned padded width

    NB = min(N, 8)                           # batch images per grid step
    n_b = pl.cdiv(N, NB)

    conv_fn = functools.partial(conv_sigmoid_kernel, H=H, W=W, NB=NB)
    out = pl.pallas_call(
        conv_fn,
        out_shape=jax.ShapeDtypeStruct((N, 1, H, W), x.dtype),
        grid=(n_b,),
        in_specs=[
            pl.BlockSpec(memory_space=pltpu.MemorySpace.SMEM),      # conv weights
            pl.BlockSpec((NB, 2, H, W), lambda n: (n, 0, 0, 0)),
        ],
        out_specs=pl.BlockSpec((NB, 1, H, W), lambda n: (n, 0, 0, 0)),
        scratch_shapes=[pltpu.VMEM((NB, 2, Hp, Wp), jnp.float32)],
        # "arbitrary" (sequential) keeps the zero-once scratch invariant valid
        # even with multiple TensorCores; pass 2 is a negligible cost anyway.
        compiler_params=pltpu.CompilerParams(
            dimension_semantics=("arbitrary",)),
    )(w_flat, feat4)
    return out


def _reference(x, weight):
    avgout = jnp.mean(x, axis=1, keepdims=True)
    maxout = jnp.max(x, axis=1, keepdims=True)
    feat = jnp.concatenate([avgout, maxout], axis=1)          # [N, 2, H, W]
    out = jax.lax.conv_general_dilated(
        feat, weight, window_strides=(1, 1),
        padding=((PAD, PAD), (PAD, PAD)),
        dimension_numbers=("NCHW", "OIHW", "NCHW"))
    return jax.nn.sigmoid(out)


if __name__ == "__main__":
    key = jax.random.PRNGKey(0)
    kx, kw = jax.random.split(key)

    N, C, H, W = 2, 4, 16, 16
    x = jax.random.normal(kx, (N, C, H, W), dtype=jnp.float32)

    # nn.init.xavier_normal_(gain=0.02) on weight shape (out=1, in=2, 7, 7):
    # std = gain * sqrt(2 / (fan_in + fan_out)), fan_in = 2*7*7, fan_out = 1*7*7
    fan_in, fan_out = 2 * KSIZE * KSIZE, 1 * KSIZE * KSIZE
    std = 0.02 * (2.0 / (fan_in + fan_out)) ** 0.5
    weight = std * jax.random.normal(kw, (1, 2, KSIZE, KSIZE), dtype=jnp.float32)

    out = spatial_attention(x, weight)
    out = jax.block_until_ready(out)

    ref = _reference(x, weight)
    assert out.shape == (N, 1, H, W), out.shape
    assert jnp.allclose(out, ref, rtol=1e-4, atol=1e-5), float(
        jnp.max(jnp.abs(out - ref)))

    # Also exercise the multi-C-step / gated-tail reduction path (C > C_TILE).
    x_big_c = jax.random.normal(kx, (1, _C_TILE_MAX + 4, 16, 16),
                                dtype=jnp.float32)
    out2 = jax.block_until_ready(spatial_attention(x_big_c, weight))
    ref2 = _reference(x_big_c, weight)
    assert jnp.allclose(out2, ref2, rtol=1e-4, atol=1e-5), float(
        jnp.max(jnp.abs(out2 - ref2)))

    print("KERNEL_OK")
</pallas_src>

<mosaic_0001>
module attributes {stable_mosaic.version = 11 : i64} {
  func.func @channel_reduce_kernel(%arg0: i32, %arg1: i32, %arg2: i32, %arg3: memref<1x4x256xf32, #tpu.memory_space<vmem>>, %arg4: memref<1x2x256xf32, #tpu.memory_space<vmem>>) attributes {dimension_semantics = [#tpu.dimension_semantics<parallel>, #tpu.dimension_semantics<parallel>, #tpu.dimension_semantics<arbitrary>], iteration_bounds = array<i64: 2, 1, 1>, scalar_prefetch = 0 : i64, scratch_operands = 0 : i64, tpu.core_type = #tpu.core_type<tc>, window_params = [{transform_indices = @transform_0, window_bounds = array<i64: 1, 4, 256>}, {transform_indices = @transform_1, window_bounds = array<i64: 1, 2, 256>}]} {
    %c0 = arith.constant 0 : index
    %c0_0 = arith.constant 0 : index
    %c0_1 = arith.constant 0 : index
    %0 = vector.load %arg3[%c0, %c0_0, %c0_1] : memref<1x4x256xf32, #tpu.memory_space<vmem>>, vector<1x4x256xf32>
    %1 = vector.shape_cast %0 : vector<1x4x256xf32> to vector<4x256xf32>
    %cst = arith.constant dense<0.000000e+00> : vector<256xf32>
    %2 = vector.multi_reduction <add>, %1, %cst [0] : vector<4x256xf32> to vector<256xf32>
    %3 = vector.shape_cast %2 : vector<256xf32> to vector<1x256xf32>
    %cst_2 = arith.constant dense<0xFF800000> : vector<256xf32>
    %4 = vector.multi_reduction <maximumf>, %1, %cst_2 [0] : vector<4x256xf32> to vector<256xf32>
    %5 = vector.shape_cast %4 : vector<256xf32> to vector<1x256xf32>
    %c0_i32 = arith.constant 0 : i32
    %6 = arith.cmpi eq, %arg2, %c0_i32 : i32
    %7 = arith.extui %6 : i1 to i32
    %c0_i32_3 = arith.constant 0 : i32
    %8 = arith.cmpi ne, %7, %c0_i32_3 : i32
    scf.if %8 {
      %c0_8 = arith.constant 0 : index
      %c0_9 = arith.constant 0 : index
      %c0_10 = arith.constant 0 : index
      %15 = vector.load %arg4[%c0_8, %c0_9, %c0_10] : memref<1x2x256xf32, #tpu.memory_space<vmem>>, vector<1x1x256xf32>
      %16 = vector.shape_cast %15 : vector<1x1x256xf32> to vector<1x256xf32>
      %17 = vector.shape_cast %3 : vector<1x256xf32> to vector<1x1x256xf32>
      tpu.vector_store %arg4[%c0_8, %c0_9, %c0_10], %17 {strides = array<i32>} : memref<1x2x256xf32, #tpu.memory_space<vmem>>, vector<1x1x256xf32>,
      %c0_11 = arith.constant 0 : index
      %c1 = arith.constant 1 : index
      %c0_12 = arith.constant 0 : index
      %18 = vector.load %arg4[%c0_11, %c1, %c0_12] : memref<1x2x256xf32, #tpu.memory_space<vmem>>, vector<1x1x256xf32>
      %19 = vector.shape_cast %18 : vector<1x1x256xf32> to vector<1x256xf32>
      %20 = vector.shape_cast %5 : vector<1x256xf32> to vector<1x1x256xf32>
      tpu.vector_store %arg4[%c0_11, %c1, %c0_12], %20 {strides = array<i32>} : memref<1x2x256xf32, #tpu.memory_space<vmem>>, vector<1x1x256xf32>,
    } else {
    }
    %c0_i32_4 = arith.constant 0 : i32
    %9 = arith.cmpi sgt, %arg2, %c0_i32_4 : i32
    %10 = arith.extui %9 : i1 to i32
    %c0_i32_5 = arith.constant 0 : i32
    %11 = arith.cmpi ne, %10, %c0_i32_5 : i32
    scf.if %11 {
      %c0_8 = arith.constant 0 : index
      %c0_9 = arith.constant 0 : index
      %c0_10 = arith.constant 0 : index
      %15 = vector.load %arg4[%c0_8, %c0_9, %c0_10] : memref<1x2x256xf32, #tpu.memory_space<vmem>>, vector<1x1x256xf32>
      %16 = vector.shape_cast %15 : vector<1x1x256xf32> to vector<1x256xf32>
      %17 = arith.addf %16, %3 : vector<1x256xf32>
      %c0_11 = arith.constant 0 : index
      %c0_12 = arith.constant 0 : index
      %c0_13 = arith.constant 0 : index
      %18 = vector.load %arg4[%c0_11, %c0_12, %c0_13] : memref<1x2x256xf32, #tpu.memory_space<vmem>>, vector<1x1x256xf32>
      %19 = vector.shape_cast %18 : vector<1x1x256xf32> to vector<1x256xf32>
      %20 = vector.shape_cast %17 : vector<1x256xf32> to vector<1x1x256xf32>
      tpu.vector_store %arg4[%c0_11, %c0_12, %c0_13], %20 {strides = array<i32>} : memref<1x2x256xf32, #tpu.memory_space<vmem>>, vector<1x1x256xf32>,
      %c0_14 = arith.constant 0 : index
      %c1 = arith.constant 1 : index
      %c0_15 = arith.constant 0 : index
      %21 = vector.load %arg4[%c0_14, %c1, %c0_15] : memref<1x2x256xf32, #tpu.memory_space<vmem>>, vector<1x1x256xf32>
      %22 = vector.shape_cast %21 : vector<1x1x256xf32> to vector<1x256xf32>
      %23 = arith.maximumf %22, %5 : vector<1x256xf32>
      %c0_16 = arith.constant 0 : index
      %c1_17 = arith.constant 1 : index
      %c0_18 = arith.constant 0 : index
      %24 = vector.load %arg4[%c0_16, %c1_17, %c0_18] : memref<1x2x256xf32, #tpu.memory_space<vmem>>, vector<1x1x256xf32>
      %25 = vector.shape_cast %24 : vector<1x1x256xf32> to vector<1x256xf32>
      %26 = vector.shape_cast %23 : vector<1x256xf32> to vector<1x1x256xf32>
      tpu.vector_store %arg4[%c0_16, %c1_17, %c0_18], %26 {strides = array<i32>} : memref<1x2x256xf32, #tpu.memory_space<vmem>>, vector<1x1x256xf32>,
    } else {
    }
    %c0_i32_6 = arith.constant 0 : i32
    %12 = arith.cmpi eq, %arg2, %c0_i32_6 : i32
    %13 = arith.extui %12 : i1 to i32
    %c0_i32_7 = arith.constant 0 : i32
    %14 = arith.cmpi ne, %13, %c0_i32_7 : i32
    scf.if %14 {
      %c0_8 = arith.constant 0 : index
      %c0_9 = arith.constant 0 : index
      %c0_10 = arith.constant 0 : index
      %15 = vector.load %arg4[%c0_8, %c0_9, %c0_10] : memref<1x2x256xf32, #tpu.memory_space<vmem>>, vector<1x1x256xf32>
      %16 = vector.shape_cast %15 : vector<1x1x256xf32> to vector<1x256xf32>
      %cst_11 = arith.constant 2.500000e-01 : f32
      %17 = vector.broadcast %cst_11 : f32 to vector<1x256xf32>
      %18 = arith.mulf %16, %17 : vector<1x256xf32>
      %c0_12 = arith.constant 0 : index
      %c0_13 = arith.constant 0 : index
      %c0_14 = arith.constant 0 : index
      %19 = vector.load %arg4[%c0_12, %c0_13, %c0_14] : memref<1x2x256xf32, #tpu.memory_space<vmem>>, vector<1x1x256xf32>
      %20 = vector.shape_cast %19 : vector<1x1x256xf32> to vector<1x256xf32>
      %21 = vector.shape_cast %18 : vector<1x256xf32> to vector<1x1x256xf32>
      tpu.vector_store %arg4[%c0_12, %c0_13, %c0_14], %21 {strides = array<i32>} : memref<1x2x256xf32, #tpu.memory_space<vmem>>, vector<1x1x256xf32>,
    } else {
    }
    return
  }
  func.func @transform_0(%arg0: i32, %arg1: i32, %arg2: i32) -> (i32, i32, i32) {
    %c0_i32 = arith.constant 0 : i32
    return %arg0, %arg2, %arg1 : i32, i32, i32
  }
  func.func @transform_1(%arg0: i32, %arg1: i32, %arg2: i32) -> (i32, i32, i32) {
    %c0_i32 = arith.constant 0 : i32
    %c0_i32_0 = arith.constant 0 : i32
    return %arg0, %c0_i32, %arg1 : i32, i32, i32
  }
}

</mosaic_0001>

<llo_original>
// kernel: tpu_custom_call.1
$region0: #{tpu_custom_call.1}
  #allocation0 [shape = 'u32[]', space=smem, size = 0x4, offset = 0x4, fixed_abs, tag = 'smem constant byte address 0x4 - core index']
  #allocation1 [shape = 'u32[144,128]{1,0:T(1,128)}', space=vmem, size = 0x12000, scoped, tag = 'internal scratch']
  %s0 = inlined_call_operand.hbm [shape: f32[2,4,256], index: 0, kind: input, shape index: {}]
  %s1 = inlined_call_operand.hbm [shape: f32[2,2,256], index: 1, kind: output, shape index: {}]
  %s2 = sld [smem:[#allocation0]]
  $region53: #{tpu_custom_call.1} parent=0
    _
  %s4 = ssub.s32 1, %s2
  %s5 = scalar_select 0, %s4, %s2
  $region1: #{tpu_custom_call.1} parent=0
    #allocation2 [shape = 'u8[8192]{0}', space=vmem, size = 0x2000, scoped, tag = 'input window, operand 0']
    #allocation3 [shape = 's32[2]{0}', space=sflag, size = 0x8, scoped, tag = 'scoped memory for tpu_custom_call.1']
    #allocation4 [shape = 's32[2]{0}', space=sflag, size = 0x8, scoped, tag = 'scoped memory for tpu_custom_call.1']
    #allocation5 [shape = 'u8[4096]{0}', space=vmem, size = 0x1000, scoped, tag = 'output window, operand 0']
    %6 = vsyncpa [#allocation3], 0
    %s7 = scalar_lea.sflag [#allocation3], 1
    %8 = vsyncpa %s7, 0
    %9 = vsyncpa [#allocation4], 0
    %s10 = scalar_lea.sflag [#allocation4], 1
    %11 = vsyncpa %s10, 0
    loop: start=0, step=1, limit=4
    $region2: #{tpu_custom_call.1} parent=1 // loop_pre_header
      _
    $region3: #{tpu_custom_call.1} parent=1 // loop_header
      %s13 = sphi 0, %s17
      %p14 = scmp.ge.s32.totalorder %s13, 4
      %s20 = sphi 0, %s39
      %s21 = sphi 0, %s35
      %s22 = sphi 0, %s31
      %s23 = sphi 0, %s20
      %s24 = sphi 0, %s21
      %s25 = sphi 0, %s22
      %s26 = sphi 0, %s23
      %s27 = sphi 0, %s24
      %s28 = sphi 0, %s25
      %s46 = sphi 0, %s48
      %s49 = sphi 0, %s46
      %s50 = sphi 0, %s49
      %s66 = sphi 0, %s50
      %s74 = sphi 0, %s76
      %s77 = sphi 0, %s74
      %s78 = sphi 0, %s77
      %s94 = sphi 0, %s78
    $region4: #{tpu_custom_call.1} parent=1 // loop_header_branch
      %16 = sbr.rel (%p14) target = $region8
    $region5: #{tpu_custom_call.1} parent=1 // loop_body
      %s18 = ssub.s32 %s13, 1
      %s19 = ssub.s32 %s13, 2
      %s29 = sadd.s32 1, %s22
      %p30 = scmp.ge.s32.totalorder %s29, 1
      %s31 = scalar_select %p30, 0, %s29
      %s32 = sadd.s32 1, %s21
      %s33 = scalar_select %p30, %s32, %s21
      %p34 = scmp.ge.s32.totalorder %s33, 1
      %s35 = scalar_select %p34, 0, %s33
      %s36 = sadd.s32 1, %s20
      %s37 = scalar_select %p34, %s36, %s20
      %p38 = scmp.ge.s32.totalorder %s37, 2
      %s39 = scalar_select %p38, 0, %s37
      %s40 = ssub.s32 %s20, %s39
      %s41 = ssub.s32 %s22, %s31
      %s42 = sor.u32 %s40, %s41
      %s43 = ssub.s32 %s21, %s35
      %s44 = sor.u32 %s42, %s43
      %p45 = scmp.eq.s32.totalorder %s44, 0
      %s47 = sadd.s32 %s46, 1
      %s48 = scalar_select %p45, %s46, %s47
      %p51 = pneg %p45
      %p52 = scmp.eq.s32.totalorder %s13, 1
      %p53 = por %p51, %p52
      %p54 = scmp.ne.s32.totalorder %s46, %s49
      %p55 = scmp.eq.s32.totalorder %s13, 0
      %p56 = por %p54, %p55
      %p57 = scmp.ne.s32.totalorder %s46, %s49
      %p58 = scmp.eq.s32.totalorder %s18, 1
      %p59 = por %p57, %p58
      %p60 = scmp.ne.s32.totalorder %s49, %s50
      %p61 = scmp.eq.s32.totalorder %s18, 0
      %p62 = por %p60, %p61
      %p63 = scmp.ne.s32.totalorder %s49, %s50
      %p64 = scmp.eq.s32.totalorder %s19, 1
      %p65 = por %p63, %p64
      %p67 = scmp.ne.s32.totalorder %s50, %s66
      %p68 = scmp.eq.s32.totalorder %s19, 0
      %p69 = por %p67, %p68
      %s70 = ssub.s32 %s20, %s39
      %s71 = ssub.s32 %s21, %s35
      %s72 = sor.u32 %s70, %s71
      %p73 = scmp.eq.s32.totalorder %s72, 0
      %s75 = sadd.s32 %s74, 1
      %s76 = scalar_select %p73, %s74, %s75
      %p79 = pneg %p73
      %p80 = scmp.eq.s32.totalorder %s13, 1
      %p81 = por %p79, %p80
      %p82 = scmp.ne.s32.totalorder %s74, %s77
      %p83 = scmp.eq.s32.totalorder %s13, 0
      %p84 = por %p82, %p83
      %p85 = scmp.ne.s32.totalorder %s74, %s77
      %p86 = scmp.eq.s32.totalorder %s18, 1
      %p87 = por %p85, %p86
      %p88 = scmp.ne.s32.totalorder %s77, %s78
      %p89 = scmp.eq.s32.totalorder %s18, 0
      %p90 = por %p88, %p89
      %p91 = scmp.ne.s32.totalorder %s77, %s78
      %p92 = scmp.eq.s32.totalorder %s19, 1
      %p93 = por %p91, %p92
      %p95 = scmp.ne.s32.totalorder %s78, %s94
      %p96 = scmp.eq.s32.totalorder %s19, 0
      %p97 = por %p95, %p96
      %p98 = scmp.le.s32.totalorder 1, %s13
      %p99 = scmp.lt.s32.totalorder %s13, 3
      %p100 = pnand %p98, %p99
      %p101 = pneg %p100
      // Predicated region
      $region9: #{tpu_custom_call.1} parent=5 // pred_check
        _
      $region10: #{tpu_custom_call.1} parent=5 // pred_check_branch
        %103 = sbr.rel (%p100) target = $region12
      $region11: #{tpu_custom_call.1} parent=5 // pred_region
        %s104 = ssub.s32 %s13, 1
      $region12: #{tpu_custom_call.1} parent=5 // pred_fallthru
        _
      %p105 = scmp.lt.s32.totalorder %s13, 2
      // Predicated region
      $region13: #{tpu_custom_call.1} parent=5 // pred_check
        %p106 = pneg %p105
      $region14: #{tpu_custom_call.1} parent=5 // pred_check_branch
        %108 = sbr.rel (%p106) target = $region16
      $region15: #{tpu_custom_call.1} parent=5 // pred_region
        // Predicated region
        $region17: #{tpu_custom_call.1} parent=15 // pred_check
          %p109 = pneg %p56
        $region18: #{tpu_custom_call.1} parent=15 // pred_check_branch
          %111 = sbr.rel (%p109) target = $region20
        $region19: #{tpu_custom_call.1} parent=15 // pred_region
          %s112 = sand.u32 %s46, 1
          %s113 = scalar_lea.sflag [#allocation3], %s112
          %s114 = sand.u32 %s46, 1
          %s115 = smul.addr %s114, 8
          %s116 = scalar_lea.vmem [#allocation2], %s115
          %s117 = smul.u32 2, %s21
          %s119 = ssub.s32 128, 128
          %120 = vsyncadd %s113, %s119
          %s121 = smul.addr %s22, 2
          %s122 = sadd.s32 %s117, %s121
          %s123 = smul.addr %s20, 2
          %s124 = sadd.s32 %s122, %s123
          %s125 = smul.addr %s124, 64
          %s126 = scalar_lea.hbm %s0, %s125
          %s128 = sshll.u32 %s116, 4
          %s129 = int_to_ptr.vmem [resolvable:$true] %s128
          %131 = dma.hbm_to_vmem [thread:$0]  %s126, 128, %s129, %s113
        $region20: #{tpu_custom_call.1} parent=15 // pred_fallthru
          _
      $region16: #{tpu_custom_call.1} parent=5 // pred_fallthru
        _
      %p132 = scmp.le.s32.totalorder 1, %s13
      %p133 = scmp.lt.s32.totalorder %s13, 3
      %p134 = pnand %p132, %p133
      %p135 = pneg %p134
      // Predicated region
      $region21: #{tpu_custom_call.1} parent=5 // pred_check
        _
      $region22: #{tpu_custom_call.1} parent=5 // pred_check_branch
        %137 = sbr.rel (%p134) target = $region24
      $region23: #{tpu_custom_call.1} parent=5 // pred_region
        %s138 = ssub.s32 %s13, 1
        %s139 = sand.u32 %s49, 1
        %s140 = scalar_lea.sflag [#allocation3], %s139
        %s141 = sand.u32 %s49, 1
        %s142 = smul.addr %s141, 8
        %s143 = scalar_lea.vmem [#allocation2], %s142
        // Predicated region
        $region25: #{tpu_custom_call.1} parent=23 // pred_check
          %p144 = pneg %p62
        $region26: #{tpu_custom_call.1} parent=23 // pred_check_branch
          %146 = sbr.rel (%p144) target = $region28
        $region27: #{tpu_custom_call.1} parent=23 // pred_region
          %147 = dma.done %s140, 128
        $region28: #{tpu_custom_call.1} parent=23 // pred_fallthru
          _
        %s148 = sand.u32 %s49, 1
        %s149 = scalar_lea.sflag [#allocation3], %s148
        %s150 = sand.u32 %s49, 1
        %s151 = smul.addr %s150, 8
        %s152 = scalar_lea.vmem [#allocation2], %s151
        %p153 = pneg %p62
        %p154 = pneg %p59
        %p155 = pneg %p90
        %p156 = pneg %p87
        %s157 = sand.u32 %s77, 1
        %s158 = scalar_lea.sflag [#allocation4], %s157
        %s159 = sand.u32 %s77, 1
        %s160 = smul.addr %s159, 4
        %s161 = scalar_lea.vmem [#allocation5], %s160
        %s162 = smul.u32 2, %s24
        %s163 = smul.u32 2, %s24
        %v164 = vld [vmem:[%s143] sm:$0xff]
        %v166 = vcombine.high %v164, %v164
        %vm168 = vcmask 1043456
        %v169 = vsel %vm168, %v164, 0.0
        %v170 = vrot.slane %v169, 4
        %v171 = vadd.f32 %v169, %v170
        %v172 = vrot.slane %v171, 2
        %v173 = vadd.f32 %v171, %v172
        %v174 = vrot.slane %v173, 1
        %v175 = vadd.f32 %v173, %v174
        %v176 = vsel %vm168, %v166, 0.0
        %v177 = vrot.slane %v176, 4
        %v178 = vadd.f32 %v176, %v177
        %v179 = vrot.slane %v178, 2
        %v180 = vadd.f32 %v178, %v179
        %v181 = vrot.slane %v180, 1
        %v182 = vadd.f32 %v180, %v181
        %v183 = vsel %vm168, %v164, -inf
        %v184 = vrot.slane %v183, 4
        %v185 = vmax.f32 %v183, %v184
        %v186 = vrot.slane %v185, 2
        %v187 = vmax.f32 %v185, %v186
        %v188 = vrot.slane %v187, 1
        %v189 = vmax.f32 %v187, %v188
        %v190 = vsel %vm168, %v166, -inf
        %v191 = vrot.slane %v190, 4
        %v192 = vmax.f32 %v190, %v191
        %v193 = vrot.slane %v192, 2
        %v194 = vmax.f32 %v192, %v193
        %v195 = vrot.slane %v194, 1
        %v196 = vmax.f32 %v194, %v195
        %p197 = scmp.eq.s32.totalorder %s25, 0
        // Predicated region
        $region29: #{tpu_custom_call.1} parent=23 // pred_check
          %p198 = pneg %p197
        $region30: #{tpu_custom_call.1} parent=23 // pred_check_branch
          %200 = sbr.rel (%p198) target = $region32
        $region31: #{tpu_custom_call.1} parent=23 // pred_region
          %v203 = vcombine.low %v175, %v182
          %v205 = vunpack.c.l.s4 1966171168
          %v206 = vunpack.c.0.s8 %v205
          %v207 = vlaneseq
          %v208 = vshrl.u32 %v207, 7
          %v209 = vsub.s32 %v206, %v208
          %v210 = vrot.slane %v203, %v209
          %v212 = vunpack.c.l.s4 1966171168
          %v213 = vunpack.c.0.s8 %v212
          %v214 = vlaneseq
          %v215 = vshrl.u32 %v214, 7
          %v216 = vsub.s32 %v213, %v215
          %v217 = vrot.slane %v210, %v216
          %v219 = vlaneseq
          %vm220 = vcmp.ge.s32.totalorder %v219, 0
          %vm221 = vcmp.lt.s32.totalorder %v219, 256
          %vm222 = vmand %vm220, %vm221
          %223 = vst.msk [vmem:[%s161] ss:$2 sm:$0x3] %vm222, %v217
          %v226 = vcombine.low %v189, %v196
          %v228 = vunpack.c.l.s4 1966171168
          %v229 = vunpack.c.0.s8 %v228
          %v230 = vlaneseq
          %v231 = vshrl.u32 %v230, 7
          %v232 = vsub.s32 %v229, %v231
          %v233 = vrot.slane %v226, %v232
          %v235 = vunpack.c.l.s4 1966171168
          %v236 = vunpack.c.0.s8 %v235
          %v237 = vlaneseq
          %v238 = vshrl.u32 %v237, 7
          %v239 = vsub.s32 %v236, %v238
          %v240 = vrot.slane %v233, %v239
          %s242 = scalar_lea.vmem %s161, 1 [#allocation5]
          %243 = vst.msk [vmem:[%s242] ss:$2 sm:$0x3] %vm222, %v240
        $region32: #{tpu_custom_call.1} parent=23 // pred_fallthru
          _
        %p244 = scmp.gt.s32.totalorder %s25, 0
        // Predicated region
        $region33: #{tpu_custom_call.1} parent=23 // pred_check
          %p245 = pneg %p244
        $region34: #{tpu_custom_call.1} parent=23 // pred_check_branch
          %247 = sbr.rel (%p245) target = $region36
        $region35: #{tpu_custom_call.1} parent=23 // pred_region
          %v248 = vld [vmem:[%s161] ss:$2 sm:$0x3]
          %v251 = vcombine.low %v175, %v182
          %v253 = vunpack.c.l.s4 1966171168
          %v254 = vunpack.c.0.s8 %v253
          %v255 = vlaneseq
          %v256 = vshrl.u32 %v255, 7
          %v257 = vsub.s32 %v254, %v256
          %v258 = vrot.slane %v251, %v257
          %v260 = vunpack.c.l.s4 1966171168
          %v261 = vunpack.c.0.s8 %v260
          %v262 = vlaneseq
          %v263 = vshrl.u32 %v262, 7
          %v264 = vsub.s32 %v261, %v263
          %v265 = vrot.slane %v258, %v264
          %v267 = vadd.f32 %v248, %v265
          %v268 = vlaneseq
          %vm269 = vcmp.ge.s32.totalorder %v268, 0
          %vm270 = vcmp.lt.s32.totalorder %v268, 256
          %vm271 = vmand %vm269, %vm270
          %272 = vst.msk [vmem:[%s161] ss:$2 sm:$0x3] %vm271, %v267
          %s273 = scalar_lea.vmem %s161, 1 [#allocation5]
          %v274 = vld [vmem:[%s273] ss:$2 sm:$0x3]
          %v277 = vcombine.low %v189, %v196
          %v279 = vunpack.c.l.s4 1966171168
          %v280 = vunpack.c.0.s8 %v279
          %v281 = vlaneseq
          %v282 = vshrl.u32 %v281, 7
          %v283 = vsub.s32 %v280, %v282
          %v284 = vrot.slane %v277, %v283
          %v286 = vunpack.c.l.s4 1966171168
          %v287 = vunpack.c.0.s8 %v286
          %v288 = vlaneseq
          %v289 = vshrl.u32 %v288, 7
          %v290 = vsub.s32 %v287, %v289
          %v291 = vrot.slane %v284, %v290
          %v293 = vmax.f32 %v274, %v291
          %294 = vst.msk [vmem:[%s273] ss:$2 sm:$0x3] %vm271, %v293
        $region36: #{tpu_custom_call.1} parent=23 // pred_fallthru
          _
        // Predicated region
        $region37: #{tpu_custom_call.1} parent=23 // pred_check
          %p295 = pneg %p197
        $region38: #{tpu_custom_call.1} parent=23 // pred_check_branch
          %297 = sbr.rel (%p295) target = $region40
        $region39: #{tpu_custom_call.1} parent=23 // pred_region
          %v298 = vld [vmem:[%s161] ss:$2 sm:$0x3]
          %v299 = vmul.f32 %v298, 0.25
          %v300 = vlaneseq
          %vm301 = vcmp.ge.s32.totalorder %v300, 0
          %vm302 = vcmp.lt.s32.totalorder %v300, 256
          %vm303 = vmand %vm301, %vm302
          %304 = vst.msk [vmem:[%s161] ss:$2 sm:$0x3] %vm303, %v299
        $region40: #{tpu_custom_call.1} parent=23 // pred_fallthru
          _
        %s305 = sand.u32 %s77, 1
        %s306 = scalar_lea.sflag [#allocation4], %s305
        %s307 = sand.u32 %s77, 1
        %s308 = smul.addr %s307, 4
        %s309 = scalar_lea.vmem [#allocation5], %s308
        // Predicated region
        $region41: #{tpu_custom_call.1} parent=23 // pred_check
          %p310 = pneg %p87
        $region42: #{tpu_custom_call.1} parent=23 // pred_check_branch
          %312 = sbr.rel (%p310) target = $region44
        $region43: #{tpu_custom_call.1} parent=23 // pred_region
          %s313 = smul.u32 2, %s24
          %s315 = ssub.s32 64, 64
          %316 = vsyncadd %s306, %s315
          %s317 = smul.addr %s23, 2
          %s318 = sadd.s32 %s313, %s317
          %s319 = smul.addr %s318, 32
          %s320 = scalar_lea.hbm %s1, %s319
          %s322 = sshll.u32 %s309, 4
          %s323 = int_to_ptr.vmem [resolvable:$true] %s322
          %325 = dma.vmem_to_hbm [thread:$0]  %s323, 64, %s320, %s306
        $region44: #{tpu_custom_call.1} parent=23 // pred_fallthru
          _
      $region24: #{tpu_custom_call.1} parent=5 // pred_fallthru
        _
      %p326 = scmp.le.s32.totalorder 2, %s13
      // Predicated region
      $region45: #{tpu_custom_call.1} parent=5 // pred_check
        %p327 = pneg %p326
      $region46: #{tpu_custom_call.1} parent=5 // pred_check_branch
        %329 = sbr.rel (%p327) target = $region48
      $region47: #{tpu_custom_call.1} parent=5 // pred_region
        %s330 = ssub.s32 %s13, 2
        // Predicated region
        $region49: #{tpu_custom_call.1} parent=47 // pred_check
          %p331 = pneg %p93
        $region50: #{tpu_custom_call.1} parent=47 // pred_check_branch
          %333 = sbr.rel (%p331) target = $region52
        $region51: #{tpu_custom_call.1} parent=47 // pred_region
          %s334 = sand.u32 %s78, 1
          %s335 = scalar_lea.sflag [#allocation4], %s334
          %s336 = sand.u32 %s78, 1
          %s337 = smul.addr %s336, 4
          %s338 = scalar_lea.vmem [#allocation5], %s337
          %339 = dma.done %s335, 64
        $region52: #{tpu_custom_call.1} parent=47 // pred_fallthru
          _
      $region48: #{tpu_custom_call.1} parent=5 // pred_fallthru
        _
    $region6: #{tpu_custom_call.1} parent=1 // loop_footer
      %s17 = sadd.s32 1, %s13
    $region7: #{tpu_custom_call.1} parent=1 // loop_footer_branch
      %12 = sbr.rel target = $region3
    $region8: #{tpu_custom_call.1} parent=1 // loop_exit
      _
    %340 = vsyncpa [#allocation3], 1
    %s341 = scalar_lea.sflag [#allocation3], 1
    %342 = vsyncpa %s341, 1
    %343 = vsyncpa [#allocation4], 1
    %s344 = scalar_lea.sflag [#allocation4], 1
    %345 = vsyncpa %s344, 1

</llo_original>
